<compile_context>
chip_gen: v7x
topology: tpu7x:2x2x1
jax: 0.10.0
libtpu: 0.0.40
codegen_flags: <defaults>
</compile_context>

<pallas_src>
import jax
import jax.numpy as jnp
from jax.experimental import pallas as pl
from jax.experimental.pallas import tpu as pltpu


def san_graph_head_kernel(batch_ref, x_ref, w0_ref, b0_ref, w1_ref, b1_ref,
                          w2_ref, b2_ref, out_ref, pooled_acc, count_acc):
    """Grid = (graph-tiles, node-tiles).

    batch_ref:  [1, TN]  int32   graph id per node (padding nodes carry an
                                 out-of-range id so they match no graph row)
    x_ref:      [TN, D]  bf16    node-feature tile
    w*/b*:      resident MLP params (D -> D/2 -> D/4 -> OUT_PAD)
    out_ref:    [TB, OUT_PAD] f32 per-graph prediction (lane-dense, zero-padded)
    pooled_acc: [TB, D]  f32 scratch (segment-sum accumulator)
    count_acc:  [TB, 1]  f32 scratch (node-count accumulator)
    """
    b = pl.program_id(0)
    n = pl.program_id(1)
    TB = pooled_acc.shape[0]
    TN = x_ref.shape[0]

    # ---- init accumulators at the start of each graph-tile's reduction ----
    @pl.when(n == 0)
    def _():
        pooled_acc[...] = jnp.zeros_like(pooled_acc)
        count_acc[...] = jnp.zeros_like(count_acc)

    # ---- accumulate segment sums for this node tile (one-hot tile, bf16 MXU) ----
    row_ids = jax.lax.broadcasted_iota(jnp.int32, (TB, TN), 0) + b * TB   # [TB, TN]
    assign = (row_ids == batch_ref[...]).astype(jnp.bfloat16)             # 0/1, exact
    # Node counts: cross-lane reduce on the XLU with f32 accumulation (counts
    # per tile can exceed bf16's exact-integer range, so accumulate in f32).
    count_acc[...] += jnp.sum(assign, axis=1, keepdims=True, dtype=jnp.float32)
    pooled_acc[...] += jnp.dot(assign, x_ref[...],
                               preferred_element_type=jnp.float32)        # [TB, D] f32

    # ---- finalize: mean + 3-layer FC head, only on the last node tile ----
    @pl.when(n == pl.num_programs(1) - 1)
    def _():
        inv = pl.reciprocal(jnp.maximum(count_acc[...], 1.0), approx=True)
        h = pooled_acc[...] * inv                                          # mean pool
        h = jnp.dot(h, w0_ref[...], preferred_element_type=jnp.float32)
        h = jnp.maximum(h + b0_ref[...], 0.0)
        h = jnp.dot(h, w1_ref[...], preferred_element_type=jnp.float32)
        h = jnp.maximum(h + b1_ref[...], 0.0)
        out = jnp.dot(h, w2_ref[...], preferred_element_type=jnp.float32) + b2_ref[...]
        out_ref[...] = out.astype(out_ref.dtype)


def _round_up(v, m):
    return ((v + m - 1) // m) * m


def san_graph_head(x, batch_idx, y, params, num_graphs, dim_out):
    """Wrapper mirroring SANGraphHead.forward: returns (pred, true)."""
    N, D = x.shape
    (w0, b0), (w1, b1), (w2, b2) = params

    # ---- tile sizes ----
    # Big node tiles amortize the ~0.35us/step pipeline overhead (512 rows ~85%
    # of HBM roofline, 1024 ~86%); small N collapses to a single tile.
    if N >= 1024:
        TN = 1024
    elif N >= 512:
        TN = 512
    else:
        TN = _round_up(max(N, 8), 8)
    N_pad = _round_up(N, TN)
    # One graph tile normally covers all graphs so x is streamed exactly once.
    TB = min(_round_up(num_graphs, 8), 512)
    B_pad = _round_up(num_graphs, TB)
    OUT_PAD = _round_up(dim_out, 128)          # lane-dense output slab

    # ---- pad / cast inputs (in production x would already be bf16) ----
    x_bf = jnp.pad(x.astype(jnp.bfloat16), ((0, N_pad - N), (0, 0)))
    batch_pad = jnp.full((1, N_pad), B_pad, jnp.int32)       # pad id matches no graph
    batch_pad = batch_pad.at[0, :N].set(batch_idx.astype(jnp.int32))
    w2p = jnp.pad(w2.astype(jnp.float32), ((0, 0), (0, OUT_PAD - dim_out)))
    b2p = jnp.pad(b2.astype(jnp.float32), ((0, 0), (0, OUT_PAD - dim_out)))

    grid = (B_pad // TB, N_pad // TN)

    grid_spec = pltpu.PrefetchScalarGridSpec(
        num_scalar_prefetch=0,
        grid=grid,
        in_specs=[
            pl.BlockSpec((1, TN), lambda b, n: (0, n)),     # batch ids (node tile)
            pl.BlockSpec((TN, D), lambda b, n: (n, 0)),     # x (node tile, streamed)
            pl.BlockSpec(w0.shape, lambda b, n: (0, 0)),    # weights: resident
            pl.BlockSpec(b0.shape, lambda b, n: (0, 0)),
            pl.BlockSpec(w1.shape, lambda b, n: (0, 0)),
            pl.BlockSpec(b1.shape, lambda b, n: (0, 0)),
            pl.BlockSpec(w2p.shape, lambda b, n: (0, 0)),
            pl.BlockSpec(b2p.shape, lambda b, n: (0, 0)),
        ],
        out_specs=pl.BlockSpec((TB, OUT_PAD), lambda b, n: (b, 0)),
        scratch_shapes=[
            pltpu.VMEM((TB, D), jnp.float32),   # pooled segment-sum accumulator
            pltpu.VMEM((TB, 1), jnp.float32),   # node-count accumulator
        ],
    )

    pred_pad = pl.pallas_call(
        san_graph_head_kernel,
        out_shape=jax.ShapeDtypeStruct((B_pad, OUT_PAD), jnp.float32),
        grid_spec=grid_spec,
        compiler_params=pltpu.CompilerParams(
            dimension_semantics=("parallel", "arbitrary"),
            vmem_limit_bytes=32 * 1024 * 1024,
        ),
    )(batch_pad, x_bf, w0, b0, w1, b1, w2p, b2p)

    pred = pred_pad[:num_graphs, :dim_out]
    return pred, y


def _init_linear(key, fan_in, fan_out):
    # Deterministic PyTorch-style uniform init: U(-1/sqrt(fan_in), 1/sqrt(fan_in)).
    kw, kb = jax.random.split(key)
    bound = 1.0 / jnp.sqrt(float(fan_in))
    w = jax.random.uniform(kw, (fan_in, fan_out), jnp.float32, -bound, bound)
    b = jax.random.uniform(kb, (1, fan_out), jnp.float32, -bound, bound)
    return w, b


if __name__ == "__main__":
    key = jax.random.PRNGKey(0)
    k_x, k_y, k0, k1, k2 = jax.random.split(key, 5)

    # Small shapes: N=16 nodes, B=2 graphs, dim_in=32, L=2 => 32->16->8->1
    N, B, dim_in, dim_out, L = 16, 2, 32, 1, 2

    x = jax.random.normal(k_x, (N, dim_in), jnp.float32)              # node features
    batch_idx = jnp.repeat(jnp.arange(B, dtype=jnp.int32), N // B)    # node -> graph id
    y = jax.random.normal(k_y, (B, dim_out), jnp.float32)             # graph labels

    params = [
        _init_linear(k0, dim_in, dim_in // 2),          # FC0: 32 -> 16
        _init_linear(k1, dim_in // 2, dim_in // 4),     # FC1: 16 -> 8
        _init_linear(k2, dim_in // 2 ** L, dim_out),    # FC2: 8  -> 1
    ]

    pred, true = san_graph_head(x, batch_idx, y, params, B, dim_out)
    pred = jax.block_until_ready(pred)

    # Pure-JAX reference with the same bf16 node-feature precision the kernel reads.
    xb = x.astype(jnp.bfloat16).astype(jnp.float32)
    counts = jax.ops.segment_sum(jnp.ones((N,), jnp.float32), batch_idx, num_segments=B)
    pooled_ref = jax.ops.segment_sum(xb, batch_idx, num_segments=B) / jnp.maximum(
        counts, 1.0)[:, None]
    h = jnp.maximum(pooled_ref @ params[0][0] + params[0][1], 0.0)
    h = jnp.maximum(h @ params[1][0] + params[1][1], 0.0)
    ref = h @ params[2][0] + params[2][1]

    assert pred.shape == (B, dim_out) and true.shape == (B, dim_out)
    assert jnp.allclose(pred, ref, atol=2e-3, rtol=2e-3), (pred, ref)
    print("KERNEL_OK")
</pallas_src>

<mosaic_0001>
module attributes {stable_mosaic.version = 11 : i64} {
  func.func @san_graph_head_kernel(%arg0: i32, %arg1: i32, %arg2: memref<1x16xi32, #tpu.memory_space<vmem>>, %arg3: memref<16x32xbf16, #tpu.memory_space<vmem>>, %arg4: memref<32x16xf32, #tpu.memory_space<vmem>>, %arg5: memref<1x16xf32, #tpu.memory_space<vmem>>, %arg6: memref<16x8xf32, #tpu.memory_space<vmem>>, %arg7: memref<1x8xf32, #tpu.memory_space<vmem>>, %arg8: memref<8x128xf32, #tpu.memory_space<vmem>>, %arg9: memref<1x128xf32, #tpu.memory_space<vmem>>, %arg10: memref<8x128xf32, #tpu.memory_space<vmem>>, %arg11: memref<8x32xf32, #tpu.memory_space<vmem>>, %arg12: memref<8x1xf32, #tpu.memory_space<vmem>>) attributes {dimension_semantics = [#tpu.dimension_semantics<parallel>, #tpu.dimension_semantics<arbitrary>], iteration_bounds = array<i64: 1, 1>, scalar_prefetch = 0 : i64, scratch_operands = 2 : i64, tpu.core_type = #tpu.core_type<tc>, window_params = [{transform_indices = @transform_0, window_bounds = array<i64: 1, 16>}, {transform_indices = @transform_1, window_bounds = array<i64: 16, 32>}, {pipeline_mode = #tpu.pipeline_mode<synchronous>, transform_indices = @transform_2, window_bounds = array<i64: 32, 16>}, {pipeline_mode = #tpu.pipeline_mode<synchronous>, transform_indices = @transform_3, window_bounds = array<i64: 1, 16>}, {pipeline_mode = #tpu.pipeline_mode<synchronous>, transform_indices = @transform_4, window_bounds = array<i64: 16, 8>}, {pipeline_mode = #tpu.pipeline_mode<synchronous>, transform_indices = @transform_5, window_bounds = array<i64: 1, 8>}, {pipeline_mode = #tpu.pipeline_mode<synchronous>, transform_indices = @transform_6, window_bounds = array<i64: 8, 128>}, {pipeline_mode = #tpu.pipeline_mode<synchronous>, transform_indices = @transform_7, window_bounds = array<i64: 1, 128>}, {transform_indices = @transform_8, window_bounds = array<i64: 8, 128>}]} {
    %c0_i32 = arith.constant 0 : i32
    %0 = arith.cmpi eq, %arg1, %c0_i32 : i32
    %1 = arith.extui %0 : i1 to i32
    %c0_i32_0 = arith.constant 0 : i32
    %2 = arith.cmpi ne, %1, %c0_i32_0 : i32
    scf.if %2 {
      %cst_15 = arith.constant 0.000000e+00 : f32
      %27 = vector.broadcast %cst_15 : f32 to vector<8x32xf32>
      %c0_16 = arith.constant 0 : index
      %c0_17 = arith.constant 0 : index
      %28 = vector.load %arg11[%c0_16, %c0_17] : memref<8x32xf32, #tpu.memory_space<vmem>>, vector<8x32xf32>
      tpu.vector_store %arg11[%c0_16, %c0_17], %27 {strides = array<i32>} : memref<8x32xf32, #tpu.memory_space<vmem>>, vector<8x32xf32>,
      %cst_18 = arith.constant 0.000000e+00 : f32
      %29 = vector.broadcast %cst_18 : f32 to vector<8x1xf32>
      %c0_19 = arith.constant 0 : index
      %c0_20 = arith.constant 0 : index
      %30 = vector.load %arg12[%c0_19, %c0_20] : memref<8x1xf32, #tpu.memory_space<vmem>>, vector<8x1xf32>
      tpu.vector_store %arg12[%c0_19, %c0_20], %29 {strides = array<i32>} : memref<8x1xf32, #tpu.memory_space<vmem>>, vector<8x1xf32>,
    } else {
    }
    %3 = tpu.iota {dimensions = array<i32: 0>} : vector<8x16xi32>
    %c8_i32 = arith.constant 8 : i32
    %4 = arith.muli %arg0, %c8_i32 : i32
    %5 = vector.broadcast %4 : i32 to vector<8x16xi32>
    %6 = arith.addi %3, %5 : vector<8x16xi32>
    %c0 = arith.constant 0 : index
    %c0_1 = arith.constant 0 : index
    %7 = vector.load %arg2[%c0, %c0_1] : memref<1x16xi32, #tpu.memory_space<vmem>>, vector<1x16xi32>
    %8 = vector.broadcast %7 : vector<1x16xi32> to vector<8x16xi32>
    %9 = arith.cmpi eq, %6, %8 : vector<8x16xi32>
    %10 = arith.extui %9 : vector<8x16xi1> to vector<8x16xi32>
    %11 = arith.sitofp %10 : vector<8x16xi32> to vector<8x16xf32>
    %12 = arith.truncf %11 : vector<8x16xf32> to vector<8x16xbf16>
    %c0_2 = arith.constant 0 : index
    %c0_3 = arith.constant 0 : index
    %13 = vector.load %arg12[%c0_2, %c0_3] : memref<8x1xf32, #tpu.memory_space<vmem>>, vector<8x1xf32>
    %14 = arith.extf %12 : vector<8x16xbf16> to vector<8x16xf32>
    %cst = arith.constant dense<0.000000e+00> : vector<8xf32>
    %15 = vector.multi_reduction <add>, %14, %cst [1] : vector<8x16xf32> to vector<8xf32>
    %16 = vector.shape_cast %15 : vector<8xf32> to vector<8x1xf32>
    %17 = arith.addf %13, %16 : vector<8x1xf32>
    %c0_4 = arith.constant 0 : index
    %c0_5 = arith.constant 0 : index
    %18 = vector.load %arg12[%c0_4, %c0_5] : memref<8x1xf32, #tpu.memory_space<vmem>>, vector<8x1xf32>
    tpu.vector_store %arg12[%c0_4, %c0_5], %17 {strides = array<i32>} : memref<8x1xf32, #tpu.memory_space<vmem>>, vector<8x1xf32>,
    %c0_6 = arith.constant 0 : index
    %c0_7 = arith.constant 0 : index
    %19 = vector.load %arg11[%c0_6, %c0_7] : memref<8x32xf32, #tpu.memory_space<vmem>>, vector<8x32xf32>
    %c0_8 = arith.constant 0 : index
    %c0_9 = arith.constant 0 : index
    %20 = vector.load %arg3[%c0_8, %c0_9] : memref<16x32xbf16, #tpu.memory_space<vmem>>, vector<16x32xbf16>
    %cst_10 = arith.constant dense<0.000000e+00> : vector<8x32xf32>
    %21 = tpu.matmul %12, %20, %cst_10 {dimension_numbers = #tpu.dot_dimension_numbers<[1], [0], [0], [1], [0, 0, 1, 1], [], []>} : vector<8x16xbf16>, vector<16x32xbf16>, vector<8x32xf32> -> vector<8x32xf32>
    %22 = arith.addf %19, %21 : vector<8x32xf32>
    %c0_11 = arith.constant 0 : index
    %c0_12 = arith.constant 0 : index
    %23 = vector.load %arg11[%c0_11, %c0_12] : memref<8x32xf32, #tpu.memory_space<vmem>>, vector<8x32xf32>
    tpu.vector_store %arg11[%c0_11, %c0_12], %22 {strides = array<i32>} : memref<8x32xf32, #tpu.memory_space<vmem>>, vector<8x32xf32>,
    %c0_i32_13 = arith.constant 0 : i32
    %24 = arith.cmpi eq, %arg1, %c0_i32_13 : i32
    %25 = arith.extui %24 : i1 to i32
    %c0_i32_14 = arith.constant 0 : i32
    %26 = arith.cmpi ne, %25, %c0_i32_14 : i32
    scf.if %26 {
      %c0_15 = arith.constant 0 : index
      %c0_16 = arith.constant 0 : index
      %27 = vector.load %arg12[%c0_15, %c0_16] : memref<8x1xf32, #tpu.memory_space<vmem>>, vector<8x1xf32>
      %cst_17 = arith.constant 1.000000e+00 : f32
      %28 = vector.broadcast %cst_17 : f32 to vector<8x1xf32>
      %29 = arith.maximumf %27, %28 : vector<8x1xf32>
      %30 = tpu.reciprocal %29 {approx = true} : vector<8x1xf32> -> vector<8x1xf32>
      %c0_18 = arith.constant 0 : index
      %c0_19 = arith.constant 0 : index
      %31 = vector.load %arg11[%c0_18, %c0_19] : memref<8x32xf32, #tpu.memory_space<vmem>>, vector<8x32xf32>
      %32 = vector.broadcast %30 : vector<8x1xf32> to vector<8x32xf32>
      %33 = arith.mulf %31, %32 : vector<8x32xf32>
      %c0_20 = arith.constant 0 : index
      %c0_21 = arith.constant 0 : index
      %34 = vector.load %arg4[%c0_20, %c0_21] : memref<32x16xf32, #tpu.memory_space<vmem>>, vector<32x16xf32>
      %cst_22 = arith.constant dense<0.000000e+00> : vector<8x16xf32>
      %35 = tpu.matmul %33, %34, %cst_22 {dimension_numbers = #tpu.dot_dimension_numbers<[1], [0], [0], [1], [0, 0, 1, 1], [], []>} : vector<8x32xf32>, vector<32x16xf32>, vector<8x16xf32> -> vector<8x16xf32>
      %c0_23 = arith.constant 0 : index
      %c0_24 = arith.constant 0 : index
      %36 = vector.load %arg5[%c0_23, %c0_24] : memref<1x16xf32, #tpu.memory_space<vmem>>, vector<1x16xf32>
      %37 = vector.broadcast %36 : vector<1x16xf32> to vector<8x16xf32>
      %38 = arith.addf %35, %37 : vector<8x16xf32>
      %cst_25 = arith.constant 0.000000e+00 : f32
      %39 = vector.broadcast %cst_25 : f32 to vector<8x16xf32>
      %40 = arith.maximumf %38, %39 : vector<8x16xf32>
      %c0_26 = arith.constant 0 : index
      %c0_27 = arith.constant 0 : index
      %41 = vector.load %arg6[%c0_26, %c0_27] : memref<16x8xf32, #tpu.memory_space<vmem>>, vector<16x8xf32>
      %cst_28 = arith.constant dense<0.000000e+00> : vector<8x8xf32>
      %42 = tpu.matmul %40, %41, %cst_28 {dimension_numbers = #tpu.dot_dimension_numbers<[1], [0], [0], [1], [0, 0, 1, 1], [], []>} : vector<8x16xf32>, vector<16x8xf32>, vector<8x8xf32> -> vector<8x8xf32>
      %c0_29 = arith.constant 0 : index
      %c0_30 = arith.constant 0 : index
      %43 = vector.load %arg7[%c0_29, %c0_30] : memref<1x8xf32, #tpu.memory_space<vmem>>, vector<1x8xf32>
      %44 = vector.broadcast %43 : vector<1x8xf32> to vector<8x8xf32>
      %45 = arith.addf %42, %44 : vector<8x8xf32>
      %cst_31 = arith.constant 0.000000e+00 : f32
      %46 = vector.broadcast %cst_31 : f32 to vector<8x8xf32>
      %47 = arith.maximumf %45, %46 : vector<8x8xf32>
      %c0_32 = arith.constant 0 : index
      %c0_33 = arith.constant 0 : index
      %48 = vector.load %arg8[%c0_32, %c0_33] : memref<8x128xf32, #tpu.memory_space<vmem>>, vector<8x128xf32>
      %cst_34 = arith.constant dense<0.000000e+00> : vector<8x128xf32>
      %49 = tpu.matmul %47, %48, %cst_34 {dimension_numbers = #tpu.dot_dimension_numbers<[1], [0], [0], [1], [0, 0, 1, 1], [], []>} : vector<8x8xf32>, vector<8x128xf32>, vector<8x128xf32> -> vector<8x128xf32>
      %c0_35 = arith.constant 0 : index
      %c0_36 = arith.constant 0 : index
      %50 = vector.load %arg9[%c0_35, %c0_36] : memref<1x128xf32, #tpu.memory_space<vmem>>, vector<1x128xf32>
      %51 = vector.broadcast %50 : vector<1x128xf32> to vector<8x128xf32>
      %52 = arith.addf %49, %51 : vector<8x128xf32>
      %c0_37 = arith.constant 0 : index
      %c0_38 = arith.constant 0 : index
      %53 = vector.load %arg10[%c0_37, %c0_38] : memref<8x128xf32, #tpu.memory_space<vmem>>, vector<8x128xf32>
      tpu.vector_store %arg10[%c0_37, %c0_38], %52 {strides = array<i32>} : memref<8x128xf32, #tpu.memory_space<vmem>>, vector<8x128xf32>,
    } else {
    }
    return
  }
  func.func @transform_0(%arg0: i32, %arg1: i32) -> (i32, i32) {
    %c0_i32 = arith.constant 0 : i32
    %c0_i32_0 = arith.constant 0 : i32
    return %c0_i32, %arg1 : i32, i32
  }
  func.func @transform_1(%arg0: i32, %arg1: i32) -> (i32, i32) {
    %c0_i32 = arith.constant 0 : i32
    %c0_i32_0 = arith.constant 0 : i32
    return %arg1, %c0_i32 : i32, i32
  }
  func.func @transform_2(%arg0: i32, %arg1: i32) -> (i32, i32) {
    %c0_i32 = arith.constant 0 : i32
    %c0_i32_0 = arith.constant 0 : i32
    %c0_i32_1 = arith.constant 0 : i32
    return %c0_i32, %c0_i32_0 : i32, i32
  }
  func.func @transform_3(%arg0: i32, %arg1: i32) -> (i32, i32) {
    %c0_i32 = arith.constant 0 : i32
    %c0_i32_0 = arith.constant 0 : i32
    %c0_i32_1 = arith.constant 0 : i32
    return %c0_i32, %c0_i32_0 : i32, i32
  }
  func.func @transform_4(%arg0: i32, %arg1: i32) -> (i32, i32) {
    %c0_i32 = arith.constant 0 : i32
    %c0_i32_0 = arith.constant 0 : i32
    %c0_i32_1 = arith.constant 0 : i32
    return %c0_i32, %c0_i32_0 : i32, i32
  }
  func.func @transform_5(%arg0: i32, %arg1: i32) -> (i32, i32) {
    %c0_i32 = arith.constant 0 : i32
    %c0_i32_0 = arith.constant 0 : i32
    %c0_i32_1 = arith.constant 0 : i32
    return %c0_i32, %c0_i32_0 : i32, i32
  }
  func.func @transform_6(%arg0: i32, %arg1: i32) -> (i32, i32) {
    %c0_i32 = arith.constant 0 : i32
    %c0_i32_0 = arith.constant 0 : i32
    %c0_i32_1 = arith.constant 0 : i32
    return %c0_i32, %c0_i32_0 : i32, i32
  }
  func.func @transform_7(%arg0: i32, %arg1: i32) -> (i32, i32) {
    %c0_i32 = arith.constant 0 : i32
    %c0_i32_0 = arith.constant 0 : i32
    %c0_i32_1 = arith.constant 0 : i32
    return %c0_i32, %c0_i32_0 : i32, i32
  }
  func.func @transform_8(%arg0: i32, %arg1: i32) -> (i32, i32) {
    %c0_i32 = arith.constant 0 : i32
    %c0_i32_0 = arith.constant 0 : i32
    return %arg0, %c0_i32 : i32, i32
  }
}

</mosaic_0001>

<llo_original>
// kernel: tpu_custom_call.1
$region0: #{tpu_custom_call.1}
  #allocation0 [shape = 'u32[]', space=smem, size = 0x4, offset = 0x4, fixed_abs, tag = 'smem constant byte address 0x4 - core index']
  #allocation1 [shape = 'u32[144,128]{1,0:T(1,128)}', space=vmem, size = 0x12000, scoped, tag = 'internal scratch']
  #allocation2 [shape = 'f32[8,32]{1,0:T(8,128)}', space=vmem, size = 0x1000, scoped, tag = 'scratch operand']
  #allocation3 [shape = 'f32[8,1]{1,0:T(8,128)}', space=vmem, size = 0x1000, scoped, tag = 'scratch operand']
  %s0 = inlined_call_operand.vmem [shape: s32[1,16], index: 0, kind: input, shape index: {}]
  %s1 = inlined_call_operand.vmem [shape: bf16[16,32], index: 1, kind: input, shape index: {}]
  %s2 = inlined_call_operand.vmem [shape: f32[32,16], index: 2, kind: input, shape index: {}]
  %s3 = inlined_call_operand.vmem [shape: f32[1,16], index: 3, kind: input, shape index: {}]
  %s4 = inlined_call_operand.vmem [shape: f32[16,8], index: 4, kind: input, shape index: {}]
  %s5 = inlined_call_operand.vmem [shape: f32[1,8], index: 5, kind: input, shape index: {}]
  %s6 = inlined_call_operand.vmem [shape: f32[8,128], index: 6, kind: input, shape index: {}]
  %s7 = inlined_call_operand.vmem [shape: f32[1,128], index: 7, kind: input, shape index: {}]
  %s8 = inlined_call_operand.hbm [shape: f32[8,128], index: 8, kind: output, shape index: {}]
  %s9 = sld [smem:[#allocation0]]
  $region50: #{tpu_custom_call.1} parent=0
    _
  %s11 = ssub.s32 1, %s9
  %s12 = scalar_select 0, %s11, %s9
  $region1: #{tpu_custom_call.1} parent=0
    #allocation4 [shape = 'u8[4096]{0}', space=vmem, size = 0x1000, scoped, tag = 'output window, operand 0, single buffered']
    #allocation5 [shape = 's32[1]{0}', space=sflag, size = 0x4, scoped, tag = 'scoped memory for tpu_custom_call.1']
    %13 = vsyncpa [#allocation5], 0
    // Predicated region
    $region2: #{tpu_custom_call.1} parent=1 // pred_check
      _
    $region3: #{tpu_custom_call.1} parent=1 // pred_check_branch
      %15 = sbr.rel (0) target = $region5
    $region4: #{tpu_custom_call.1} parent=1 // pred_region
      _
    $region5: #{tpu_custom_call.1} parent=1 // pred_fallthru
      _
    // Predicated region
    $region6: #{tpu_custom_call.1} parent=1 // pred_check
      _
    $region7: #{tpu_custom_call.1} parent=1 // pred_check_branch
      %17 = sbr.rel (0) target = $region9
    $region8: #{tpu_custom_call.1} parent=1 // pred_region
      _
    $region9: #{tpu_custom_call.1} parent=1 // pred_fallthru
      _
    // Predicated region
    $region10: #{tpu_custom_call.1} parent=1 // pred_check
      _
    $region11: #{tpu_custom_call.1} parent=1 // pred_check_branch
      %19 = sbr.rel (0) target = $region13
    $region12: #{tpu_custom_call.1} parent=1 // pred_region
      _
    $region13: #{tpu_custom_call.1} parent=1 // pred_fallthru
      _
    // Predicated region
    $region14: #{tpu_custom_call.1} parent=1 // pred_check
      _
    $region15: #{tpu_custom_call.1} parent=1 // pred_check_branch
      %21 = sbr.rel (0) target = $region17
    $region16: #{tpu_custom_call.1} parent=1 // pred_region
      _
    $region17: #{tpu_custom_call.1} parent=1 // pred_fallthru
      _
    // Predicated region
    $region18: #{tpu_custom_call.1} parent=1 // pred_check
      _
    $region19: #{tpu_custom_call.1} parent=1 // pred_check_branch
      %23 = sbr.rel (0) target = $region21
    $region20: #{tpu_custom_call.1} parent=1 // pred_region
      _
    $region21: #{tpu_custom_call.1} parent=1 // pred_fallthru
      _
    // Predicated region
    $region22: #{tpu_custom_call.1} parent=1 // pred_check
      _
    $region23: #{tpu_custom_call.1} parent=1 // pred_check_branch
      %25 = sbr.rel (0) target = $region25
    $region24: #{tpu_custom_call.1} parent=1 // pred_region
      _
    $region25: #{tpu_custom_call.1} parent=1 // pred_fallthru
      _
    // Predicated region
    $region26: #{tpu_custom_call.1} parent=1 // pred_check
      _
    $region27: #{tpu_custom_call.1} parent=1 // pred_check_branch
      %27 = sbr.rel (0) target = $region29
    $region28: #{tpu_custom_call.1} parent=1 // pred_region
      _
    $region29: #{tpu_custom_call.1} parent=1 // pred_fallthru
      _
    // Predicated region
    $region30: #{tpu_custom_call.1} parent=1 // pred_check
      _
    $region31: #{tpu_custom_call.1} parent=1 // pred_check_branch
      %29 = sbr.rel (0) target = $region33
    $region32: #{tpu_custom_call.1} parent=1 // pred_region
      _
    $region33: #{tpu_custom_call.1} parent=1 // pred_fallthru
      _
    %p31 = scmp.eq.s32.totalorder 0, 0
    // Predicated region
    $region34: #{tpu_custom_call.1} parent=1 // pred_check
      %p32 = pneg %p31
    $region35: #{tpu_custom_call.1} parent=1 // pred_check_branch
      %34 = sbr.rel (%p32) target = $region37
    $region36: #{tpu_custom_call.1} parent=1 // pred_region
      %vm35 = vcmask 261120
      %36 = vst.msk [vmem:[#allocation2] sm:$0xff] %vm35, 0.0
      %vm37 = vcmask 7168
      %38 = vst.msk [vmem:[#allocation3] sm:$0xff] %vm37, 0.0
    $region37: #{tpu_custom_call.1} parent=1 // pred_fallthru
      _
    %v39 = vlaneseq
    %v40 = vshrl.u32 %v39, 7
    %s41 = smul.u32 0, 8
    %v42 = vstv %s41
    %v43 = vadd.s32 %v40, %v42
    %v44 = vld [vmem:[%s0] sm:$0x1]
    %v45 = vlaneseq
    %v46 = vshrl.u32 %v45, 7
    %v47 = vsub.s32 0, %v46
    %v48 = vrot.slane %v44, %v47
    %vm49 = vcmp.eq.s32.totalorder %v43, %v48
    %v50 = vsel %vm49, 1, 0
    %v51 = vcvt.s32.f32 %v50
    %v52 = vpack.c.bf16 %v51, %v51
    %v53 = vld [vmem:[#allocation3] sm:$0xff]
    %v54 = vunpack.c.l.bf16 %v52
    %vm55 = vcmask 130048
    %v56 = vsel %vm55, %v54, 0.0
    %57 = vadd.xlane.f32.xlu0 %v56
    %v58 = vpop.xlane.xlu0 %57
    %v59 = vadd.f32 %v53, %v58
    %vm60 = vcmask 7168
    %61 = vst.msk [vmem:[#allocation3] sm:$0xff] %vm60, %v59
    %v62 = vld [vmem:[#allocation2] sm:$0xff]
    %v63 = vld [vmem:[%s1] sm:$0xf]
    %v64 = vld [vmem:[%s1 + $0x4] sm:$0xf]
    %v67 = vunpack.c.l.b16 %v63
    %v68 = vunpack.c.l.b16 %v64
    %v69 = vpack.c.b16 %v68, %v67
    %v72 = vsel %vm55, %v52, 0
    %74 = vmatprep.subr.bf16.mxu0 0
    %75 = vmatpush1.bf16.msra.mxu0 %v69
    %76 = vmatprep.subr.bf16.mxu0 0
    %77 = vmatpush1.bf16.msra.mxu0 0
    %78 = vmatprep.subr.bf16.mxu0 0
    %79 = vmatpush1.bf16.msra.mxu0 0
    %80 = vmatprep.subr.bf16.mxu0 0
    %81 = vmatpush1.bf16.msra.mxu0 0
    %82 = vmatprep.subr.bf16.mxu0 0
    %83 = vmatpush1.bf16.msra.mxu0 0
    %84 = vmatprep.subr.bf16.mxu0 0
    %85 = vmatpush1.bf16.msra.mxu0 0
    %86 = vmatprep.subr.bf16.mxu0 0
    %87 = vmatpush1.bf16.msra.mxu0 0
    %88 = vmatprep.subr.bf16.mxu0 0
    %89 = vmatpush1.bf16.msra.mxu0 0
    %90 = vmatprep.subr.bf16.mxu0 0
    %91 = vmatpush1.bf16.msra.mxu0 0
    %92 = vmatprep.subr.bf16.mxu0 0
    %93 = vmatpush1.bf16.msra.mxu0 0
    %94 = vmatprep.subr.bf16.mxu0 0
    %95 = vmatpush1.bf16.msra.mxu0 0
    %96 = vmatprep.subr.bf16.mxu0 0
    %97 = vmatpush1.bf16.msra.mxu0 0
    %98 = vmatprep.subr.bf16.mxu0 0
    %99 = vmatpush1.bf16.msra.mxu0 0
    %100 = vmatprep.subr.bf16.mxu0 0
    %101 = vmatpush1.bf16.msra.mxu0 0
    %102 = vmatprep.subr.bf16.mxu0 0
    %103 = vmatpush1.bf16.msra.mxu0 0
    %104 = vmatprep.subr.bf16.mxu0 0
    %105 = vmatpush1.bf16.msra.mxu0 0
    %106 = vmatprep.mubr.bf16.mxu0 0
    %107 = vmatmul.mubr.bf16.gmra.mrb[0].mxu0 %v72
    %v108 = vpop.f32.mrb[0].mxu0
    %v109 = vadd.f32 0.0, %v108
    %v110 = vpop.f32.mrb[0].mxu0
    %v111 = vpop.f32.mrb[0].mxu0
    %v112 = vpop.f32.mrb[0].mxu0
    %113 = vdwg.mxu0
    %v114 = vadd.f32 %v62, %v109
    %vm115 = vcmask 261120
    %116 = vst.msk [vmem:[#allocation2] sm:$0xff] %vm115, %v114
    // Predicated region
    $region38: #{tpu_custom_call.1} parent=1 // pred_check
      %p117 = pneg %p31
    $region39: #{tpu_custom_call.1} parent=1 // pred_check_branch
      %119 = sbr.rel (%p117) target = $region41
    $region40: #{tpu_custom_call.1} parent=1 // pred_region
      %v120 = vld [vmem:[#allocation3] sm:$0xff]
      %v121 = vmax.f32 %v120, 1.0
      %v122 = vrcp.pop %v121
      %v123 = vld [vmem:[#allocation2] sm:$0xff]
      %125 = vset.pattern.permute.xlu0 0
      %126 = vperm.xlu0 %125, %v122
      %v127 = vpop.permute.xlu0 %126
      %v129 = vmul.f32 %v123, %v127
      %v130 = vld [vmem:[%s2] sm:$0xff]
      %v131 = vld [vmem:[%s2 + $0x8] sm:$0xff]
      %v132 = vld [vmem:[%s2 + $0x10] sm:$0xff]
      %v133 = vld [vmem:[%s2 + $0x18] sm:$0xff]
      %v134 = vld [vmem:[%s3] sm:$0x1]
      %v136 = vlaneseq
      %v137 = vshrl.u32 %v136, 7
      %v138 = vsub.s32 0, %v137
      %v139 = vrot.slane %v134, %v138
      %v142 = vsel %vm115, %v129, 0
      %144 = vmatprep.subr.mxu0 0.0
      %145 = vmatpush1.msra.mxu0 %v130
      %146 = vmatprep.subr.mxu0 0.0
      %147 = vmatpush1.msra.mxu0 %v131
      %148 = vmatprep.subr.mxu0 0.0
      %149 = vmatpush1.msra.mxu0 %v132
      %150 = vmatprep.subr.mxu0 0.0
      %151 = vmatpush1.msra.mxu0 %v133
      %152 = vmatprep.subr.mxu0 0.0
      %153 = vmatpush1.msra.mxu0 0.0
      %154 = vmatprep.subr.mxu0 0.0
      %155 = vmatpush1.msra.mxu0 0.0
      %156 = vmatprep.subr.mxu0 0.0
      %157 = vmatpush1.msra.mxu0 0.0
      %158 = vmatprep.subr.mxu0 0.0
      %159 = vmatpush1.msra.mxu0 0.0
      %160 = vmatprep.subr.mxu0 0.0
      %161 = vmatpush1.msra.mxu0 0.0
      %162 = vmatprep.subr.mxu0 0.0
      %163 = vmatpush1.msra.mxu0 0.0
      %164 = vmatprep.subr.mxu0 0.0
      %165 = vmatpush1.msra.mxu0 0.0
      %166 = vmatprep.subr.mxu0 0.0
      %167 = vmatpush1.msra.mxu0 0.0
      %168 = vmatprep.subr.mxu0 0.0
      %169 = vmatpush1.msra.mxu0 0.0
      %170 = vmatprep.subr.mxu0 0.0
      %171 = vmatpush1.msra.mxu0 0.0
      %172 = vmatprep.subr.mxu0 0.0
      %173 = vmatpush1.msra.mxu0 0.0
      %174 = vmatprep.subr.mxu0 0.0
      %175 = vmatpush1.msra.mxu0 0.0
      %176 = vmatprep.subr.mxu0 0.0
      %177 = vmatpush1.msra.mxu0 0.0
      %178 = vmatprep.subr.mxu0 0.0
      %179 = vmatpush1.msra.mxu0 0.0
      %180 = vmatprep.subr.mxu0 0.0
      %181 = vmatpush1.msra.mxu0 0.0
      %182 = vmatprep.subr.mxu0 0.0
      %183 = vmatpush1.msra.mxu0 0.0
      %184 = vmatprep.subr.mxu0 0.0
      %185 = vmatpush1.msra.mxu0 0.0
      %186 = vmatprep.subr.mxu0 0.0
      %187 = vmatpush1.msra.mxu0 0.0
      %188 = vmatprep.subr.mxu0 0.0
      %189 = vmatpush1.msra.mxu0 0.0
      %190 = vmatprep.subr.mxu0 0.0
      %191 = vmatpush1.msra.mxu0 0.0
      %192 = vmatprep.subr.mxu0 0.0
      %193 = vmatpush1.msra.mxu0 0.0
      %194 = vmatprep.subr.mxu0 0.0
      %195 = vmatpush1.msra.mxu0 0.0
      %196 = vmatprep.subr.mxu0 0.0
      %197 = vmatpush1.msra.mxu0 0.0
      %198 = vmatprep.subr.mxu0 0.0
      %199 = vmatpush1.msra.mxu0 0.0
      %200 = vmatprep.subr.mxu0 0.0
      %201 = vmatpush1.msra.mxu0 0.0
      %202 = vmatprep.subr.mxu0 0.0
      %203 = vmatpush1.msra.mxu0 0.0
      %204 = vmatprep.subr.mxu0 0.0
      %205 = vmatpush1.msra.mxu0 0.0
      %206 = vmatprep.subr.mxu0 0.0
      %207 = vmatpush1.msra.mxu0 0.0
      %208 = vmatprep.mubr.f32.mxu0 0.0
      %209 = vmatmul.mubr.f32.gmra.mrb[0].mxu0 %v142
      %v210 = vpop.f32.mrb[0].mxu0
      %v211 = vadd.f32 %v139, %v210
      %v212 = vpop.f32.mrb[0].mxu0
      %213 = vdwg.mxu0
      %v214 = vmax.f32 %v211, 0.0
      %v215 = vld [vmem:[%s4] sm:$0xff]
      %v216 = vld [vmem:[%s4 + $0x8] sm:$0xff]
      %v217 = vld [vmem:[%s5] sm:$0x1]
      %v219 = vlaneseq
      %v220 = vshrl.u32 %v219, 7
      %v221 = vsub.s32 0, %v220
      %v222 = vrot.slane %v217, %v221
      %v225 = vsel %vm55, %v214, 0
      %227 = vmatprep.subr.mxu0 0.0
      %228 = vmatpush1.msra.mxu0 %v215
      %229 = vmatprep.subr.mxu0 0.0
      %230 = vmatpush1.msra.mxu0 %v216
      %231 = vmatprep.subr.mxu0 0.0
      %232 = vmatpush1.msra.mxu0 0.0
      %233 = vmatprep.subr.mxu0 0.0
      %234 = vmatpush1.msra.mxu0 0.0
      %235 = vmatprep.subr.mxu0 0.0
      %236 = vmatpush1.msra.mxu0 0.0
      %237 = vmatprep.subr.mxu0 0.0
      %238 = vmatpush1.msra.mxu0 0.0
      %239 = vmatprep.subr.mxu0 0.0
      %240 = vmatpush1.msra.mxu0 0.0
      %241 = vmatprep.subr.mxu0 0.0
      %242 = vmatpush1.msra.mxu0 0.0
      %243 = vmatprep.subr.mxu0 0.0
      %244 = vmatpush1.msra.mxu0 0.0
      %245 = vmatprep.subr.mxu0 0.0
      %246 = vmatpush1.msra.mxu0 0.0
      %247 = vmatprep.subr.mxu0 0.0
      %248 = vmatpush1.msra.mxu0 0.0
      %249 = vmatprep.subr.mxu0 0.0
      %250 = vmatpush1.msra.mxu0 0.0
      %251 = vmatprep.subr.mxu0 0.0
      %252 = vmatpush1.msra.mxu0 0.0
      %253 = vmatprep.subr.mxu0 0.0
      %254 = vmatpush1.msra.mxu0 0.0
      %255 = vmatprep.subr.mxu0 0.0
      %256 = vmatpush1.msra.mxu0 0.0
      %257 = vmatprep.subr.mxu0 0.0
      %258 = vmatpush1.msra.mxu0 0.0
      %259 = vmatprep.subr.mxu0 0.0
      %260 = vmatpush1.msra.mxu0 0.0
      %261 = vmatprep.subr.mxu0 0.0
      %262 = vmatpush1.msra.mxu0 0.0
      %263 = vmatprep.subr.mxu0 0.0
      %264 = vmatpush1.msra.mxu0 0.0
      %265 = vmatprep.subr.mxu0 0.0
      %266 = vmatpush1.msra.mxu0 0.0
      %267 = vmatprep.subr.mxu0 0.0
      %268 = vmatpush1.msra.mxu0 0.0
      %269 = vmatprep.subr.mxu0 0.0
      %270 = vmatpush1.msra.mxu0 0.0
      %271 = vmatprep.subr.mxu0 0.0
      %272 = vmatpush1.msra.mxu0 0.0
      %273 = vmatprep.subr.mxu0 0.0
      %274 = vmatpush1.msra.mxu0 0.0
      %275 = vmatprep.subr.mxu0 0.0
      %276 = vmatpush1.msra.mxu0 0.0
      %277 = vmatprep.subr.mxu0 0.0
      %278 = vmatpush1.msra.mxu0 0.0
      %279 = vmatprep.subr.mxu0 0.0
      %280 = vmatpush1.msra.mxu0 0.0
      %281 = vmatprep.subr.mxu0 0.0
      %282 = vmatpush1.msra.mxu0 0.0
      %283 = vmatprep.subr.mxu0 0.0
      %284 = vmatpush1.msra.mxu0 0.0
      %285 = vmatprep.subr.mxu0 0.0
      %286 = vmatpush1.msra.mxu0 0.0
      %287 = vmatprep.subr.mxu0 0.0
      %288 = vmatpush1.msra.mxu0 0.0
      %289 = vmatprep.subr.mxu0 0.0
      %290 = vmatpush1.msra.mxu0 0.0
      %291 = vmatprep.mubr.f32.mxu0 0.0
      %292 = vmatmul.mubr.f32.gmra.mrb[0].mxu0 %v225
      %v293 = vpop.f32.mrb[0].mxu0
      %v294 = vadd.f32 %v222, %v293
      %v295 = vpop.f32.mrb[0].mxu0
      %296 = vdwg.mxu0
      %v297 = vmax.f32 %v294, 0.0
      %v298 = vld [vmem:[%s6] sm:$0xff]
      %v299 = vld [vmem:[%s7] sm:$0x1]
      %v301 = vlaneseq
      %v302 = vshrl.u32 %v301, 7
      %v303 = vsub.s32 0, %v302
      %v304 = vrot.slane %v299, %v303
      %vm306 = vcmask 64512
      %v308 = vsel %vm306, %v297, 0
      %310 = vmatprep.subr.mxu0 0.0
      %311 = vmatpush1.msra.mxu0 %v298
      %312 = vmatprep.subr.mxu0 0.0
      %313 = vmatpush1.msra.mxu0 0.0
      %314 = vmatprep.subr.mxu0 0.0
      %315 = vmatpush1.msra.mxu0 0.0
      %316 = vmatprep.subr.mxu0 0.0
      %317 = vmatpush1.msra.mxu0 0.0
      %318 = vmatprep.subr.mxu0 0.0
      %319 = vmatpush1.msra.mxu0 0.0
      %320 = vmatprep.subr.mxu0 0.0
      %321 = vmatpush1.msra.mxu0 0.0
      %322 = vmatprep.subr.mxu0 0.0
      %323 = vmatpush1.msra.mxu0 0.0
      %324 = vmatprep.subr.mxu0 0.0
      %325 = vmatpush1.msra.mxu0 0.0
      %326 = vmatprep.subr.mxu0 0.0
      %327 = vmatpush1.msra.mxu0 0.0
      %328 = vmatprep.subr.mxu0 0.0
      %329 = vmatpush1.msra.mxu0 0.0
      %330 = vmatprep.subr.mxu0 0.0
      %331 = vmatpush1.msra.mxu0 0.0
      %332 = vmatprep.subr.mxu0 0.0
      %333 = vmatpush1.msra.mxu0 0.0
      %334 = vmatprep.subr.mxu0 0.0
      %335 = vmatpush1.msra.mxu0 0.0
      %336 = vmatprep.subr.mxu0 0.0
      %337 = vmatpush1.msra.mxu0 0.0
      %338 = vmatprep.subr.mxu0 0.0
      %339 = vmatpush1.msra.mxu0 0.0
      %340 = vmatprep.subr.mxu0 0.0
      %341 = vmatpush1.msra.mxu0 0.0
      %342 = vmatprep.subr.mxu0 0.0
      %343 = vmatpush1.msra.mxu0 0.0
      %344 = vmatprep.subr.mxu0 0.0
      %345 = vmatpush1.msra.mxu0 0.0
      %346 = vmatprep.subr.mxu0 0.0
      %347 = vmatpush1.msra.mxu0 0.0
      %348 = vmatprep.subr.mxu0 0.0
      %349 = vmatpush1.msra.mxu0 0.0
      %350 = vmatprep.subr.mxu0 0.0
      %351 = vmatpush1.msra.mxu0 0.0
      %352 = vmatprep.subr.mxu0 0.0
      %353 = vmatpush1.msra.mxu0 0.0
      %354 = vmatprep.subr.mxu0 0.0
      %355 = vmatpush1.msra.mxu0 0.0
      %356 = vmatprep.subr.mxu0 0.0
      %357 = vmatpush1.msra.mxu0 0.0
      %358 = vmatprep.subr.mxu0 0.0
      %359 = vmatpush1.msra.mxu0 0.0
      %360 = vmatprep.subr.mxu0 0.0
      %361 = vmatpush1.msra.mxu0 0.0
      %362 = vmatprep.subr.mxu0 0.0
      %363 = vmatpush1.msra.mxu0 0.0
      %364 = vmatprep.subr.mxu0 0.0
      %365 = vmatpush1.msra.mxu0 0.0
      %366 = vmatprep.subr.mxu0 0.0
      %367 = vmatpush1.msra.mxu0 0.0
      %368 = vmatprep.subr.mxu0 0.0
      %369 = vmatpush1.msra.mxu0 0.0
      %370 = vmatprep.subr.mxu0 0.0
      %371 = vmatpush1.msra.mxu0 0.0
      %372 = vmatprep.subr.mxu0 0.0
      %373 = vmatpush1.msra.mxu0 0.0
      %374 = vmatprep.mubr.f32.mxu0 0.0
      %375 = vmatmul.mubr.f32.gmra.mrb[0].mxu0 %v308
      %v376 = vpop.f32.mrb[0].mxu0
      %v377 = vadd.f32 %v304, %v376
      %v378 = vpop.f32.mrb[0].mxu0
      %379 = vdwg.mxu0
      %380 = vst [vmem:[#allocation4] sm:$0xff] %v377
    $region41: #{tpu_custom_call.1} parent=1 // pred_fallthru
      _
    // Predicated region
    $region42: #{tpu_custom_call.1} parent=1 // pred_check
      _
    $region43: #{tpu_custom_call.1} parent=1 // pred_check_branch
      %382 = sbr.rel (0) target = $region45
    $region44: #{tpu_custom_call.1} parent=1 // pred_region
      %s384 = ssub.s32 128, 128
      %385 = vsyncadd [#allocation5], %s384
      %s387 = sshll.u32 [#allocation4], 4
      %s388 = int_to_ptr.vmem [resolvable:$true] %s387
      %390 = dma.vmem_to_hbm [thread:$0]  %s388, 128, %s8, [#allocation5]
    $region45: #{tpu_custom_call.1} parent=1 // pred_fallthru
      _
    // Predicated region
    $region46: #{tpu_custom_call.1} parent=1 // pred_check
      _
    $region47: #{tpu_custom_call.1} parent=1 // pred_check_branch
      %392 = sbr.rel (0) target = $region49
    $region48: #{tpu_custom_call.1} parent=1 // pred_region
      %393 = dma.done [#allocation5], 128
    $region49: #{tpu_custom_call.1} parent=1 // pred_fallthru
      _
    %394 = vsyncpa [#allocation5], 1

</llo_original>
